<compile_context>
chip_gen: v6e
topology: v6e:2x2x1
jax: 0.10.0
libtpu: 0.0.40
codegen_flags: <defaults>
</compile_context>

<pallas_src>
from typing import NamedTuple

import jax
import jax.numpy as jnp
from jax.experimental import pallas as pl
from jax.experimental.pallas import tpu as pltpu


def _round_up(x, m):
    return (x + m - 1) // m * m


def _cdiv(a, b):
    return (a + b - 1) // b


class QnetLayout(NamedTuple):
    S_pad: int
    H_pad: int
    A_pad: int
    W: int
    K: int
    b1_row: int
    w2_row: int
    b2_row: int


def qnet_layout(state_dim, hidden_dim, action_dim) -> QnetLayout:
    S_pad = _round_up(max(state_dim, 1), 8)       # sublane-aligned
    H_pad = _round_up(max(hidden_dim, 1), 128)    # lane-aligned
    A_pad = _round_up(max(action_dim, 1), 128)    # lane-aligned
    W = max(H_pad, A_pad)
    b1_row = S_pad                                 # 8-aligned row offsets ->
    w2_row = S_pad + 8                             # in-kernel slices never cross
    b2_row = w2_row + H_pad                        # an (8,128) tile boundary
    K = b2_row + 8
    return QnetLayout(S_pad, H_pad, A_pad, W, K, b1_row, w2_row, b2_row)


def pack_qnet_params(w1, b1, w2, b2, compute_dtype=jnp.float32):
    """Pack (w1, b1, w2, b2) into one padded [K, W] slab (single DMA).

    Call ONCE at init / whenever parameters change — never in the per-step
    act()/train() path (review item 1: packing was previously rebuilt on every
    forward and dominated the dispatch-bound act loop).
    """
    S, H = w1.shape
    A = w2.shape[1]
    lay = qnet_layout(S, H, A)

    def pad2(m, rows, cols):
        return jnp.pad(m, ((0, rows - m.shape[0]), (0, cols - m.shape[1])))

    slab = jnp.concatenate(
        [
            pad2(w1, lay.S_pad, lay.W),             # rows [0, S_pad)
            pad2(b1.reshape(1, H), 8, lay.W),        # rows [S_pad, S_pad+8), bias row 0
            pad2(w2, lay.H_pad, lay.W),              # rows [w2_row, w2_row+H_pad)
            pad2(b2.reshape(1, A), 8, lay.W),        # rows [b2_row, b2_row+8), bias row 0
        ],
        axis=0,
    ).astype(compute_dtype)
    assert slab.shape == (lay.K, lay.W)
    return slab


def _make_qnet_kernel(lay: QnetLayout, A: int, action_mode: str):
    """action_mode: 'none' (training), 'fold' (argmax into spare Q lane),
    'separate' (argmax to its own (Bt,1) output; only if A is a multiple of 128)."""
    S_pad, H_pad, A_pad = lay.S_pad, lay.H_pad, lay.A_pad
    b1_row, w2_row, b2_row = lay.b1_row, lay.w2_row, lay.b2_row

    def _q_tile(x_ref, p_ref):
        f32 = jnp.float32
        x = x_ref[...]                                              # [Bt, S_pad]
        # Static, sublane/lane-aligned slices into the packed parameter slab.
        w1 = p_ref[pl.ds(0, S_pad), pl.ds(0, H_pad)]                # [S_pad, H_pad]
        b1 = p_ref[pl.ds(b1_row, 1), pl.ds(0, H_pad)].astype(f32)   # [1, H_pad]
        w2 = p_ref[pl.ds(w2_row, H_pad), pl.ds(0, A_pad)]           # [H_pad, A_pad]
        b2 = p_ref[pl.ds(b2_row, 1), pl.ds(0, A_pad)].astype(f32)   # [1, A_pad]

        # fc1 + ReLU: MXU matmul with f32 accumulation; bias/ReLU in f32 (VPU).
        h = jnp.dot(x, w1, preferred_element_type=f32)
        h = jnp.maximum(h + b1, 0.0)
        # fc2: cast intermediate back to compute dtype for the MXU.
        q = jnp.dot(h.astype(w2.dtype), w2, preferred_element_type=f32)
        return q + b2                                               # [Bt, A_pad] f32

    def _greedy(q):
        # Lowest-index argmax over the real A lanes (padded lanes masked to -inf).
        lane = jax.lax.broadcasted_iota(jnp.int32, q.shape, 1)
        qm = jnp.where(lane < A, q, -jnp.inf)
        rmax = jnp.max(qm, axis=-1, keepdims=True)
        cand = jnp.where(qm >= rmax, lane, jnp.int32(A_pad))
        return jnp.min(cand, axis=-1, keepdims=True).astype(jnp.int32), lane

    if action_mode == "none":
        # Training path: no epilogue, single lane-dense store.
        def kernel(x_ref, p_ref, q_ref):
            q_ref[...] = _q_tile(x_ref, p_ref).astype(q_ref.dtype)
        return kernel

    if action_mode == "fold":
        # act() path: stash the greedy action (small exact integer) in padded
        # lane A of the Q tile -> one lane-dense store, no extra output DMA.
        def kernel(x_ref, p_ref, q_ref):
            q = _q_tile(x_ref, p_ref)
            act, lane = _greedy(q)
            q = jnp.where(lane == A, act.astype(q.dtype), q)
            q_ref[...] = q.astype(q_ref.dtype)
        return kernel

    # 'separate': rare fallback when action_dim is an exact multiple of 128.
    def kernel(x_ref, p_ref, q_ref, a_ref):
        q = _q_tile(x_ref, p_ref)
        act, _ = _greedy(q)
        q_ref[...] = q.astype(q_ref.dtype)
        a_ref[...] = act
    return kernel


def make_qnet_forward(state_dim, hidden_dim, action_dim, *,
                      compute_dtype=jnp.float32, out_dtype=jnp.float32,
                      return_action=False, bt_max=1024, split_min_rows=512):
    """Build a jitted forward(x, slab) for fixed layer sizes.

    x: [B, state_dim] float; slab: pre-packed params from pack_qnet_params()
    (same compute_dtype).  Returns Q [B, action_dim] (float32 by default), and
    additionally the fused greedy action [B] int32 when return_action=True.
    """
    S, A = state_dim, action_dim
    lay = qnet_layout(state_dim, hidden_dim, action_dim)
    S_pad, H_pad, A_pad, W, K = lay.S_pad, lay.H_pad, lay.A_pad, lay.W, lay.K

    action_mode = "none"
    if return_action:
        action_mode = "fold" if A < A_pad else "separate"
    kernel = _make_qnet_kernel(lay, A, action_mode)
    in_itemsize = jnp.dtype(compute_dtype).itemsize
    out_itemsize = jnp.dtype(out_dtype).itemsize

    def forward(x, slab):
        if x.ndim != 2 or x.shape[1] != S:
            raise ValueError(f"expected x of shape [B, {S}], got {x.shape}")
        if slab.shape != (K, W) or slab.dtype != jnp.dtype(compute_dtype):
            raise ValueError("param slab does not match layout / compute_dtype; "
                             "re-pack with pack_qnet_params(..., compute_dtype)")
        B = x.shape[0]

        # Adaptive batch tiling (review items 4-6): large tiles (per-grid-step
        # overhead dominates these tiny matmuls), minimal padding, and >= 2
        # grid steps for big batches so v7x's two TensorCores both get work.
        n_tiles = max(1, _cdiv(B, bt_max))
        if n_tiles == 1 and B >= split_min_rows:
            n_tiles = 2
        Bt = _round_up(_cdiv(B, n_tiles), 8)
        B_pad = Bt * n_tiles

        x_pad = jnp.pad(x, ((0, B_pad - B), (0, S_pad - S))).astype(compute_dtype)

        x_spec = pl.BlockSpec((Bt, S_pad), lambda i: (i, 0))
        # Grid-invariant parameter slab: one DMA, one (single-buffered) VMEM copy.
        p_spec = pl.BlockSpec((K, W), lambda i: (0, 0),
                              pipeline_mode=pl.Buffered(1))
        q_spec = pl.BlockSpec((Bt, A_pad), lambda i: (i, 0))      # lane-dense store

        if action_mode == "separate":
            out_shape = (jax.ShapeDtypeStruct((B_pad, A_pad), out_dtype),
                         jax.ShapeDtypeStruct((B_pad, 1), jnp.int32))
            out_specs = (q_spec, pl.BlockSpec((Bt, 1), lambda i: (i, 0)))
        else:
            out_shape = jax.ShapeDtypeStruct((B_pad, A_pad), out_dtype)
            out_specs = q_spec

        cost = pl.CostEstimate(
            flops=2 * B_pad * S_pad * H_pad + 2 * B_pad * H_pad * A_pad,
            transcendentals=0,
            bytes_accessed=(B_pad * S_pad * in_itemsize + K * W * in_itemsize
                            + B_pad * A_pad * out_itemsize),
        )

        result = pl.pallas_call(
            kernel,
            out_shape=out_shape,
            grid_spec=pltpu.PrefetchScalarGridSpec(
                num_scalar_prefetch=0,
                grid=(n_tiles,),
                in_specs=[x_spec, p_spec],
                out_specs=out_specs,
            ),
            compiler_params=pltpu.CompilerParams(
                dimension_semantics=("parallel",),   # both TCs on v7x when grid >= 2
            ),
            cost_estimate=cost,
        )(x_pad, slab)

        if action_mode == "none":
            return result[:B, :A]
        if action_mode == "fold":
            q_pad = result
            return q_pad[:B, :A], q_pad[:B, A].astype(jnp.int32)
        q_pad, a_pad = result
        return q_pad[:B, :A], a_pad[:B, 0]

    # jit so pad/cast/slice fuse into a single dispatch per step (review item 10).
    return jax.jit(forward)


def init_qnet_params(key, state_dim, hidden_dim, action_dim):
    """Deterministic init mirroring PyTorch nn.Linear default U(-1/sqrt(in), 1/sqrt(in))."""
    k1, k2, k3, k4 = jax.random.split(key, 4)
    lim1 = 1.0 / jnp.sqrt(jnp.float32(state_dim))
    lim2 = 1.0 / jnp.sqrt(jnp.float32(hidden_dim))
    # stored as [in, out] (transposed relative to PyTorch's [out, in])
    w1 = jax.random.uniform(k1, (state_dim, hidden_dim), jnp.float32, -lim1, lim1)
    b1 = jax.random.uniform(k2, (hidden_dim,), jnp.float32, -lim1, lim1)
    w2 = jax.random.uniform(k3, (hidden_dim, action_dim), jnp.float32, -lim2, lim2)
    b2 = jax.random.uniform(k4, (action_dim,), jnp.float32, -lim2, lim2)
    return w1, b1, w2, b2


def qnet_reference(x, w1, b1, w2, b2):
    h = jnp.maximum(x @ w1 + b1, 0.0)
    return h @ w2 + b2


if __name__ == "__main__":
    # CartPole-ish sizes: state_dim=4, hidden_dim=32, action_dim=2
    state_dim, hidden_dim, action_dim = 4, 32, 2
    key = jax.random.PRNGKey(0)
    kx, kp, kb = jax.random.split(key, 3)

    w1, b1, w2, b2 = init_qnet_params(kp, state_dim, hidden_dim, action_dim)
    # Pack parameters ONCE (hoisted out of the per-step path).
    slab_f32 = pack_qnet_params(w1, b1, w2, b2, jnp.float32)

    # --- act() path: batch=2, fused greedy action, exact f32 ------------------
    x = jax.random.normal(kx, (2, state_dim), jnp.float32)
    ref = qnet_reference(x, w1, b1, w2, b2)
    act_fn = make_qnet_forward(state_dim, hidden_dim, action_dim,
                               compute_dtype=jnp.float32, return_action=True)
    q, a = act_fn(x, slab_f32)
    q, a = jax.block_until_ready((q, a))
    assert q.shape == (2, action_dim) and a.shape == (2,)
    assert jnp.allclose(q, ref, atol=1e-5, rtol=1e-5), "f32 act-path mismatch vs reference"
    assert jnp.array_equal(a, jnp.argmax(q, axis=-1).astype(jnp.int32)), \
        "fused argmax mismatch"

    # --- training path: batch=64, no argmax epilogue, single Q output ---------
    xb = jax.random.normal(kb, (64, state_dim), jnp.float32)
    refb = qnet_reference(xb, w1, b1, w2, b2)
    train_fn = make_qnet_forward(state_dim, hidden_dim, action_dim,
                                 compute_dtype=jnp.float32, return_action=False)
    qb = jax.block_until_ready(train_fn(xb, slab_f32))
    assert qb.shape == (64, action_dim)
    assert jnp.allclose(qb, refb, atol=1e-5, rtol=1e-5), "f32 train-path mismatch vs reference"

    # --- optional bf16-in / f32-accumulate inference path (skip on v5e) -------
    slab_bf16 = pack_qnet_params(w1, b1, w2, b2, jnp.bfloat16)
    bf16_fn = make_qnet_forward(state_dim, hidden_dim, action_dim,
                                compute_dtype=jnp.bfloat16, return_action=False)
    q16 = jax.block_until_ready(bf16_fn(x, slab_bf16))
    assert q16.shape == (2, action_dim)
    assert jnp.allclose(q16, ref, atol=5e-2, rtol=5e-2), "bf16 mismatch vs reference"

    print("KERNEL_OK")
</pallas_src>

<mosaic_0001>
module attributes {stable_mosaic.version = 11 : i64} {
  func.func @kernel(%arg0: i32, %arg1: memref<8x8xf32, #tpu.memory_space<vmem>>, %arg2: memref<152x128xf32, #tpu.memory_space<vmem>>, %arg3: memref<8x128xf32, #tpu.memory_space<vmem>>) attributes {dimension_semantics = [#tpu.dimension_semantics<parallel>], iteration_bounds = array<i64: 1>, scalar_prefetch = 0 : i64, scratch_operands = 0 : i64, tpu.core_type = #tpu.core_type<tc>, window_params = [{transform_indices = @transform_0, window_bounds = array<i64: 8, 8>}, {pipeline_mode = #tpu.pipeline_mode<synchronous>, transform_indices = @transform_1, window_bounds = array<i64: 152, 128>}, {transform_indices = @transform_2, window_bounds = array<i64: 8, 128>}]} {
    %c0 = arith.constant 0 : index
    %c0_0 = arith.constant 0 : index
    %0 = vector.load %arg1[%c0, %c0_0] : memref<8x8xf32, #tpu.memory_space<vmem>>, vector<8x8xf32>
    %c0_1 = arith.constant 0 : index
    %c0_2 = arith.constant 0 : index
    %1 = vector.load %arg2[%c0_1, %c0_2] : memref<152x128xf32, #tpu.memory_space<vmem>>, vector<8x128xf32>
    %c8 = arith.constant 8 : index
    %c0_3 = arith.constant 0 : index
    %2 = vector.load %arg2[%c8, %c0_3] : memref<152x128xf32, #tpu.memory_space<vmem>>, vector<1x128xf32>
    %c16 = arith.constant 16 : index
    %c0_4 = arith.constant 0 : index
    %3 = vector.load %arg2[%c16, %c0_4] : memref<152x128xf32, #tpu.memory_space<vmem>>, vector<128x128xf32>
    %c144 = arith.constant 144 : index
    %c0_5 = arith.constant 0 : index
    %4 = vector.load %arg2[%c144, %c0_5] : memref<152x128xf32, #tpu.memory_space<vmem>>, vector<1x128xf32>
    %cst = arith.constant dense<0.000000e+00> : vector<8x128xf32>
    %5 = tpu.matmul %0, %1, %cst {dimension_numbers = #tpu.dot_dimension_numbers<[1], [0], [0], [1], [0, 0, 1, 1], [], []>} : vector<8x8xf32>, vector<8x128xf32>, vector<8x128xf32> -> vector<8x128xf32>
    %6 = vector.broadcast %2 : vector<1x128xf32> to vector<8x128xf32>
    %7 = arith.addf %5, %6 : vector<8x128xf32>
    %cst_6 = arith.constant 0.000000e+00 : f32
    %8 = vector.broadcast %cst_6 : f32 to vector<8x128xf32>
    %9 = arith.maximumf %7, %8 : vector<8x128xf32>
    %cst_7 = arith.constant dense<0.000000e+00> : vector<8x128xf32>
    %10 = tpu.matmul %9, %3, %cst_7 {dimension_numbers = #tpu.dot_dimension_numbers<[1], [0], [0], [1], [0, 0, 1, 1], [], []>} : vector<8x128xf32>, vector<128x128xf32>, vector<8x128xf32> -> vector<8x128xf32>
    %11 = vector.broadcast %4 : vector<1x128xf32> to vector<8x128xf32>
    %12 = arith.addf %10, %11 : vector<8x128xf32>
    %13 = tpu.iota {dimensions = array<i32: 1>} : vector<8x128xi32>
    %c2_i32 = arith.constant 2 : i32
    %14 = vector.broadcast %c2_i32 : i32 to vector<8x128xi32>
    %15 = arith.cmpi slt, %13, %14 : vector<8x128xi32>
    %cst_8 = arith.constant 0xFF800000 : f32
    %16 = vector.broadcast %cst_8 : f32 to vector<8x128xf32>
    %17 = arith.select %15, %12, %16 : vector<8x128xi1>, vector<8x128xf32>
    %cst_9 = arith.constant dense<0xFF800000> : vector<8xf32>
    %18 = vector.multi_reduction <maximumf>, %17, %cst_9 [1] : vector<8x128xf32> to vector<8xf32>
    %19 = vector.shape_cast %18 : vector<8xf32> to vector<8x1xf32>
    %20 = vector.broadcast %19 : vector<8x1xf32> to vector<8x128xf32>
    %21 = arith.cmpf oge, %17, %20 : vector<8x128xf32>
    %c128_i32 = arith.constant 128 : i32
    %22 = vector.broadcast %c128_i32 : i32 to vector<8x128xi32>
    %23 = arith.select %21, %13, %22 : vector<8x128xi1>, vector<8x128xi32>
    %cst_10 = arith.constant dense<2147483647> : vector<8xi32>
    %24 = vector.multi_reduction <minsi>, %23, %cst_10 [1] : vector<8x128xi32> to vector<8xi32>
    %25 = vector.shape_cast %24 : vector<8xi32> to vector<8x1xi32>
    %c2_i32_11 = arith.constant 2 : i32
    %26 = vector.broadcast %c2_i32_11 : i32 to vector<8x128xi32>
    %27 = arith.cmpi eq, %13, %26 : vector<8x128xi32>
    %28 = arith.sitofp %25 : vector<8x1xi32> to vector<8x1xf32>
    %29 = vector.shape_cast %28 : vector<8x1xf32> to vector<8x1xf32>
    %30 = vector.broadcast %29 : vector<8x1xf32> to vector<8x128xf32>
    %31 = arith.select %27, %30, %12 : vector<8x128xi1>, vector<8x128xf32>
    %c0_12 = arith.constant 0 : index
    %c0_13 = arith.constant 0 : index
    %32 = vector.load %arg3[%c0_12, %c0_13] : memref<8x128xf32, #tpu.memory_space<vmem>>, vector<8x128xf32>
    tpu.vector_store %arg3[%c0_12, %c0_13], %31 {strides = array<i32>} : memref<8x128xf32, #tpu.memory_space<vmem>>, vector<8x128xf32>,
    return
  }
  func.func @transform_0(%arg0: i32) -> (i32, i32) {
    %c0_i32 = arith.constant 0 : i32
    %c0_i32_0 = arith.constant 0 : i32
    return %arg0, %c0_i32 : i32, i32
  }
  func.func @transform_1(%arg0: i32) -> (i32, i32) {
    %c0_i32 = arith.constant 0 : i32
    %c0_i32_0 = arith.constant 0 : i32
    %c0_i32_1 = arith.constant 0 : i32
    return %c0_i32, %c0_i32_0 : i32, i32
  }
  func.func @transform_2(%arg0: i32) -> (i32, i32) {
    %c0_i32 = arith.constant 0 : i32
    %c0_i32_0 = arith.constant 0 : i32
    return %arg0, %c0_i32 : i32, i32
  }
}

</mosaic_0001>

<llo_original>
// kernel: forward.1
$region0: #{forward.1}
  #allocation0 [shape = 'u32[]', space=smem, size = 0x4, offset = 0x4, fixed_abs, tag = 'smem constant byte address 0x4 - core index']
  #allocation1 [shape = 'u32[144,128]{1,0:T(1,128)}', space=vmem, size = 0x12000, scoped, tag = 'internal scratch']
  %s0 = inlined_call_operand.vmem [shape: f32[8,8], index: 0, kind: input, shape index: {}]
  %s1 = inlined_call_operand.hbm [shape: f32[152,128], index: 1, kind: input, shape index: {}]
  %s2 = inlined_call_operand.vmem [shape: f32[8,128], index: 2, kind: output, shape index: {}]
  %s3 = sld [smem:[#allocation0]]
  $region22: #{forward.1} parent=0
    _
  %s5 = ssub.s32 1, %s3
  %s6 = scalar_select 0, %s5, %s3
  $region1: #{forward.1} parent=0
    #allocation2 [shape = 'u8[77824]{0}', space=vmem, size = 0x13000, scoped, tag = 'input window, operand 1, single buffered']
    #allocation3 [shape = 's32[1]{0}', space=sflag, size = 0x4, scoped, tag = 'scoped memory for forward.1']
    %7 = vsyncpa [#allocation3], 0
    // Predicated region
    $region2: #{forward.1} parent=1 // pred_check
      _
    $region3: #{forward.1} parent=1 // pred_check_branch
      %9 = sbr.rel (0) target = $region5
    $region4: #{forward.1} parent=1 // pred_region
      _
    $region5: #{forward.1} parent=1 // pred_fallthru
      _
    // Predicated region
    $region6: #{forward.1} parent=1 // pred_check
      _
    $region7: #{forward.1} parent=1 // pred_check_branch
      %11 = sbr.rel (0) target = $region9
    $region8: #{forward.1} parent=1 // pred_region
      %s13 = ssub.s32 2432, 2432
      %14 = vsyncadd [#allocation3], %s13
      %s15 = sshll.u32 [#allocation2], 4
      %s16 = int_to_ptr.vmem [resolvable:$true] %s15
      %21 = dma.hbm_to_vmem [thread:$0]  %s1, 2432, %s16, [#allocation3], 128, 128, 8
    $region9: #{forward.1} parent=1 // pred_fallthru
      _
    // Predicated region
    $region10: #{forward.1} parent=1 // pred_check
      _
    $region11: #{forward.1} parent=1 // pred_check_branch
      %23 = sbr.rel (0) target = $region13
    $region12: #{forward.1} parent=1 // pred_region
      %24 = dma.done [#allocation3], 2432
    $region13: #{forward.1} parent=1 // pred_fallthru
      _
    %v25 = vld [vmem:[%s0] sm:$0xff]
    %v26 = vld [vmem:[#allocation2] sm:$0xff]
    %v27 = vld [vmem:[#allocation2 + $0x8] sm:$0x1]
    %v28 = vld [vmem:[#allocation2 + $0x10] sm:$0xff]
    %v29 = vld [vmem:[#allocation2 + $0x18] sm:$0xff]
    %v30 = vld [vmem:[#allocation2 + $0x20] sm:$0xff]
    %v31 = vld [vmem:[#allocation2 + $0x28] sm:$0xff]
    %v32 = vld [vmem:[#allocation2 + $0x30] sm:$0xff]
    %v33 = vld [vmem:[#allocation2 + $0x38] sm:$0xff]
    %v34 = vld [vmem:[#allocation2 + $0x40] sm:$0xff]
    %v35 = vld [vmem:[#allocation2 + $0x48] sm:$0xff]
    %v36 = vld [vmem:[#allocation2 + $0x50] sm:$0xff]
    %v37 = vld [vmem:[#allocation2 + $0x58] sm:$0xff]
    %v38 = vld [vmem:[#allocation2 + $0x60] sm:$0xff]
    %v39 = vld [vmem:[#allocation2 + $0x68] sm:$0xff]
    %v40 = vld [vmem:[#allocation2 + $0x70] sm:$0xff]
    %v41 = vld [vmem:[#allocation2 + $0x78] sm:$0xff]
    %v42 = vld [vmem:[#allocation2 + $0x80] sm:$0xff]
    %v43 = vld [vmem:[#allocation2 + $0x88] sm:$0xff]
    %v44 = vld [vmem:[#allocation2 + $0x90] sm:$0x1]
    %v45 = vlaneseq
    %v46 = vshrl.u32 %v45, 7
    %v47 = vsub.s32 0, %v46
    %v48 = vrot.slane %v27, %v47
    %vm49 = vcmask 64512
    %v51 = vsel %vm49, %v25, 0
    %53 = vmatprep.subr.mxu0 0.0
    %54 = vmatpush1.msra.mxu0 0.0
    %55 = vmatprep.subr.mxu0 0.0
    %56 = vmatpush1.msra.mxu0 0.0
    %57 = vmatprep.subr.mxu0 0.0
    %58 = vmatpush1.msra.mxu0 0.0
    %59 = vmatprep.subr.mxu0 0.0
    %60 = vmatpush1.msra.mxu0 0.0
    %61 = vmatprep.subr.mxu0 0.0
    %62 = vmatpush1.msra.mxu0 0.0
    %63 = vmatprep.subr.mxu0 0.0
    %64 = vmatpush1.msra.mxu0 0.0
    %65 = vmatprep.subr.mxu0 0.0
    %66 = vmatpush1.msra.mxu0 0.0
    %67 = vmatprep.subr.mxu0 0.0
    %68 = vmatpush1.msra.mxu0 0.0
    %69 = vmatprep.subr.mxu0 0.0
    %70 = vmatpush1.msra.mxu0 0.0
    %71 = vmatprep.subr.mxu0 0.0
    %72 = vmatpush1.msra.mxu0 0.0
    %73 = vmatprep.subr.mxu0 0.0
    %74 = vmatpush1.msra.mxu0 0.0
    %75 = vmatprep.subr.mxu0 0.0
    %76 = vmatpush1.msra.mxu0 0.0
    %77 = vmatprep.subr.mxu0 0.0
    %78 = vmatpush1.msra.mxu0 0.0
    %79 = vmatprep.subr.mxu0 0.0
    %80 = vmatpush1.msra.mxu0 0.0
    %81 = vmatprep.subr.mxu0 0.0
    %82 = vmatpush1.msra.mxu0 0.0
    %83 = vmatprep.subr.mxu0 0.0
    %84 = vmatpush1.msra.mxu0 %v26
    %85 = vmatprep.subr.mxu0 0.0
    %86 = vmatpush2.msra.mxu0 0.0
    %87 = vmatprep.subr.mxu0 0.0
    %88 = vmatpush2.msra.mxu0 0.0
    %89 = vmatprep.subr.mxu0 0.0
    %90 = vmatpush2.msra.mxu0 0.0
    %91 = vmatprep.subr.mxu0 0.0
    %92 = vmatpush2.msra.mxu0 0.0
    %93 = vmatprep.subr.mxu0 0.0
    %94 = vmatpush2.msra.mxu0 0.0
    %95 = vmatprep.subr.mxu0 0.0
    %96 = vmatpush2.msra.mxu0 0.0
    %97 = vmatprep.subr.mxu0 0.0
    %98 = vmatpush2.msra.mxu0 0.0
    %99 = vmatprep.subr.mxu0 0.0
    %100 = vmatpush2.msra.mxu0 0.0
    %101 = vmatprep.subr.mxu0 0.0
    %102 = vmatpush2.msra.mxu0 0.0
    %103 = vmatprep.subr.mxu0 0.0
    %104 = vmatpush2.msra.mxu0 0.0
    %105 = vmatprep.subr.mxu0 0.0
    %106 = vmatpush2.msra.mxu0 0.0
    %107 = vmatprep.subr.mxu0 0.0
    %108 = vmatpush2.msra.mxu0 0.0
    %109 = vmatprep.subr.mxu0 0.0
    %110 = vmatpush2.msra.mxu0 0.0
    %111 = vmatprep.subr.mxu0 0.0
    %112 = vmatpush2.msra.mxu0 0.0
    %113 = vmatprep.subr.mxu0 0.0
    %114 = vmatpush2.msra.mxu0 0.0
    %115 = vmatprep.subr.mxu0 0.0
    %116 = vmatpush2.msra.mxu0 0.0
    %117 = vmatprep.mubr.f32.mxu0 0.0
    %118 = vmatmul.mubr.f32.gmra.mxu0 %v51
    %v119 = vpop.f32.mrf.mxu0
    %v120 = vadd.f32 %v48, %v119
    %v121 = vpop.f32.mrf.mxu0
    %122 = vdwg.mxu0
    %v123 = vmax.f32 %v120, 0.0
    %v124 = vlaneseq
    %v125 = vshrl.u32 %v124, 7
    %v126 = vsub.s32 0, %v125
    %v127 = vrot.slane %v44, %v126
    %128 = vmatprep.subr.mxu0 0.0
    %129 = vmatpush1.msra.mxu0 %v43
    %130 = vmatprep.subr.mxu0 0.0
    %131 = vmatpush1.msra.mxu0 %v42
    %132 = vmatprep.subr.mxu0 0.0
    %133 = vmatpush1.msra.mxu0 %v41
    %134 = vmatprep.subr.mxu0 0.0
    %135 = vmatpush1.msra.mxu0 %v40
    %136 = vmatprep.subr.mxu0 0.0
    %137 = vmatpush1.msra.mxu0 %v39
    %138 = vmatprep.subr.mxu0 0.0
    %139 = vmatpush1.msra.mxu0 %v38
    %140 = vmatprep.subr.mxu0 0.0
    %141 = vmatpush1.msra.mxu0 %v37
    %142 = vmatprep.subr.mxu0 0.0
    %143 = vmatpush1.msra.mxu0 %v36
    %144 = vmatprep.subr.mxu0 0.0
    %145 = vmatpush1.msra.mxu0 %v35
    %146 = vmatprep.subr.mxu0 0.0
    %147 = vmatpush1.msra.mxu0 %v34
    %148 = vmatprep.subr.mxu0 0.0
    %149 = vmatpush1.msra.mxu0 %v33
    %150 = vmatprep.subr.mxu0 0.0
    %151 = vmatpush1.msra.mxu0 %v32
    %152 = vmatprep.subr.mxu0 0.0
    %153 = vmatpush1.msra.mxu0 %v31
    %154 = vmatprep.subr.mxu0 0.0
    %155 = vmatpush1.msra.mxu0 %v30
    %156 = vmatprep.subr.mxu0 0.0
    %157 = vmatpush1.msra.mxu0 %v29
    %158 = vmatprep.subr.mxu0 0.0
    %159 = vmatpush1.msra.mxu0 %v28
    %160 = vmatprep.subr.mxu0 0.0
    %161 = vmatpush2.msra.mxu0 0.0
    %162 = vmatprep.subr.mxu0 0.0
    %163 = vmatpush2.msra.mxu0 0.0
    %164 = vmatprep.subr.mxu0 0.0
    %165 = vmatpush2.msra.mxu0 0.0
    %166 = vmatprep.subr.mxu0 0.0
    %167 = vmatpush2.msra.mxu0 0.0
    %168 = vmatprep.subr.mxu0 0.0
    %169 = vmatpush2.msra.mxu0 0.0
    %170 = vmatprep.subr.mxu0 0.0
    %171 = vmatpush2.msra.mxu0 0.0
    %172 = vmatprep.subr.mxu0 0.0
    %173 = vmatpush2.msra.mxu0 0.0
    %174 = vmatprep.subr.mxu0 0.0
    %175 = vmatpush2.msra.mxu0 0.0
    %176 = vmatprep.subr.mxu0 0.0
    %177 = vmatpush2.msra.mxu0 0.0
    %178 = vmatprep.subr.mxu0 0.0
    %179 = vmatpush2.msra.mxu0 0.0
    %180 = vmatprep.subr.mxu0 0.0
    %181 = vmatpush2.msra.mxu0 0.0
    %182 = vmatprep.subr.mxu0 0.0
    %183 = vmatpush2.msra.mxu0 0.0
    %184 = vmatprep.subr.mxu0 0.0
    %185 = vmatpush2.msra.mxu0 0.0
    %186 = vmatprep.subr.mxu0 0.0
    %187 = vmatpush2.msra.mxu0 0.0
    %188 = vmatprep.subr.mxu0 0.0
    %189 = vmatpush2.msra.mxu0 0.0
    %190 = vmatprep.subr.mxu0 0.0
    %191 = vmatpush2.msra.mxu0 0.0
    %192 = vmatprep.mubr.f32.mxu0 0.0
    %193 = vmatmul.mubr.f32.gmra.mxu0 %v123
    %v194 = vpop.f32.mrf.mxu0
    %v195 = vadd.f32 %v127, %v194
    %v196 = vpop.f32.mrf.mxu0
    %197 = vdwg.mxu0
    %v198 = vlaneseq
    %v199 = vand.u32 %v198, 127
    %vm200 = vcmp.lt.s32.totalorder %v199, 2
    %v201 = vsel %vm200, %v195, -inf
    %202 = vmax.xlane.f32.xlu0 %v201
    %v203 = vpop.xlane.xlu0 %202
    %vm204 = vcmp.ge.f32.partialorder %v201, %v203
    %v205 = vsel %vm204, %v199, 128
    %v206 = vand.u32 %v205, 65535
    %v207 = vshra.s32 %v205, 16
    %v208 = vcvt.s32.f32 %v206
    %v209 = vcvt.s32.f32 %v207
    %210 = vmin.xlane.f32.xlu0 %v209
    %v211 = vpop.xlane.xlu0 %210
    %vm212 = vcmp.eq.f32.partialorder %v209, %v211
    %v213 = vsel %vm212, %v208, inf
    %214 = vmin.xlane.f32.xlu0 %v213
    %v215 = vpop.xlane.xlu0 %214
    %v216 = vcvt.f32.s32 %v215
    %v217 = vcvt.f32.s32 %v211
    %v218 = vshll.u32 %v217, 16
    %v219 = vadd.s32 %v218, %v216
    %vm220 = vcmp.eq.s32.totalorder %v199, 2
    %v221 = vcvt.s32.f32 %v219
    %v222 = vsel %vm220, %v221, %v195
    %223 = vst [vmem:[%s2] sm:$0xff] %v222
    // Predicated region
    $region14: #{forward.1} parent=1 // pred_check
      _
    $region15: #{forward.1} parent=1 // pred_check_branch
      %225 = sbr.rel (0) target = $region17
    $region16: #{forward.1} parent=1 // pred_region
      _
    $region17: #{forward.1} parent=1 // pred_fallthru
      _
    // Predicated region
    $region18: #{forward.1} parent=1 // pred_check
      _
    $region19: #{forward.1} parent=1 // pred_check_branch
      %227 = sbr.rel (0) target = $region21
    $region20: #{forward.1} parent=1 // pred_region
      _
    $region21: #{forward.1} parent=1 // pred_fallthru
      _
    %228 = vsyncpa [#allocation3], 1

</llo_original>
